<compile_context>
chip_gen: v7x
topology: tpu7x:2x2x1
jax: 0.10.0
libtpu: 0.0.40
codegen_flags: <defaults>
</compile_context>

<pallas_src>
import functools

import jax
import jax.numpy as jnp
from jax.experimental import pallas as pl
from jax.experimental.pallas import tpu as pltpu

EPS = 1e-5
# 2048 rows x 1024 feats x 4 B = 8 MiB f32 x tile (16 MiB double-buffered);
# fits comfortably under the 32 MiB vmem limit requested below on all of
# v5e / v6e / v7x.  (On v7x one could push to 4096 with a higher limit.)
TILE_B = 2048
VMEM_LIMIT_BYTES = 32 * 1024 * 1024


def _linear_ln_relu_kernel(x_ref, w_ref, p_ref, o_ref, *, matmul_dtype):
    # Cast the tile to the MXU dtype *inside* the kernel (no extra HBM pass in
    # the wrapper); accumulation stays f32 via preferred_element_type.
    x = x_ref[...]
    w = w_ref[...]
    if matmul_dtype is not None:
        x = x.astype(matmul_dtype)
        w = w.astype(matmul_dtype)
    y = jnp.dot(x, w, preferred_element_type=jnp.float32)   # [tb, N] f32

    params = p_ref[...].astype(jnp.float32)     # (3, N): bias, gamma, beta
    bias = params[0:1, :]
    gamma = params[1:2, :]
    beta = params[2:3, :]

    y = y + bias                                # bias before LayerNorm (nn.Linear)

    # LayerNorm over the feature axis, two-pass (numerically robust) form:
    #   mean = sum(y)/N ; var = sum((y-mean)^2)/N   (biased variance)
    inv_n = 1.0 / y.shape[-1]
    mean = jnp.sum(y, axis=-1, keepdims=True) * inv_n
    d = y - mean
    var = jnp.sum(d * d, axis=-1, keepdims=True) * inv_n
    y_hat = d * jax.lax.rsqrt(var + EPS)
    y_hat = y_hat * gamma + beta

    # ReLU
    o_ref[...] = jnp.maximum(y_hat, 0.0).astype(o_ref.dtype)


def linear_layer_forward(x, w, b, gamma, beta, *, tile_b=TILE_B,
                         matmul_dtype=jnp.bfloat16):
    """Fused forward of LinearLayer: flatten -> linear -> layernorm -> relu.

    x:     [B, ...]                       (flattened to [B, in_features])
    w:     [in_features, out_features]    (transposed PyTorch weight)
    b:     [out_features]
    gamma: [out_features]                 (LayerNorm weight)
    beta:  [out_features]                 (LayerNorm bias)
    """
    # _try_squeeze: flatten trailing dims (matches torch.flatten(x, 1)).
    if x.ndim > 2:
        x = x.reshape(x.shape[0], -1)

    B, K = x.shape
    K2, N = w.shape
    assert K == K2, f"in_features mismatch: {K} vs {K2}"
    out_dtype = x.dtype

    # dropout=0 -> no dropout module; nothing to do here.

    # Pack the three tiny per-feature vectors into one (3, N) operand (single
    # DMA descriptor, fetched once since its index_map is constant).
    params = jnp.stack([b, gamma, beta], axis=0).astype(jnp.float32)

    # Batch tiling.  tb == B (full dim) when B is small -> always a legal
    # block shape; otherwise tb == tile_b and the last tile may be ragged
    # (Pallas clamps the DMAs; the unused rows are never written back).
    tb = min(tile_b, B)
    grid = (pl.cdiv(B, tb),)

    kernel = functools.partial(_linear_ln_relu_kernel, matmul_dtype=matmul_dtype)

    out = pl.pallas_call(
        kernel,
        out_shape=jax.ShapeDtypeStruct((B, N), out_dtype),
        grid_spec=pltpu.PrefetchScalarGridSpec(
            num_scalar_prefetch=0,
            grid=grid,
            in_specs=[
                pl.BlockSpec((tb, K), lambda i: (i, 0)),   # x tile, pipelined
                pl.BlockSpec((K, N), lambda i: (0, 0)),    # weights, VMEM-resident
                pl.BlockSpec((3, N), lambda i: (0, 0)),    # bias/gamma/beta packed
            ],
            out_specs=pl.BlockSpec((tb, N), lambda i: (i, 0)),
        ),
        compiler_params=pltpu.CompilerParams(
            dimension_semantics=("parallel",),   # independent batch tiles
            vmem_limit_bytes=VMEM_LIMIT_BYTES,   # 16 MiB x double-buffer + slack
        ),
    )(x, w, params)
    return out


def _reference(xf, w, b, gamma, beta, matmul_dtype):
    """Pure-JAX reference (optionally matching the narrowed-matmul path)."""
    if matmul_dtype is not None:
        y = jnp.dot(xf.astype(matmul_dtype), w.astype(matmul_dtype),
                    preferred_element_type=jnp.float32) + b
    else:
        y = xf @ w + b
    mu = y.mean(-1, keepdims=True)
    var = ((y - mu) ** 2).mean(-1, keepdims=True)
    return jnp.maximum((y - mu) / jnp.sqrt(var + EPS) * gamma + beta, 0.0)


if __name__ == "__main__":
    # NCHW input flattened to [B, C*H*W] = [2, 4*16*16] = [2, 1024].
    B, C, H, W = 2, 4, 16, 16
    in_features = C * H * W      # 1024
    out_features = 32

    key = jax.random.PRNGKey(0)
    kx, kw, kb, kx2 = jax.random.split(key, 4)

    x = jax.random.normal(kx, (B, C, H, W), dtype=jnp.float32)

    limit = 1.0 / (in_features ** 0.5)
    w = jax.random.uniform(kw, (in_features, out_features),
                           minval=-limit, maxval=limit, dtype=jnp.float32)
    b = jax.random.uniform(kb, (out_features,),
                           minval=-limit, maxval=limit, dtype=jnp.float32)
    gamma = jnp.ones((out_features,), dtype=jnp.float32)   # LayerNorm weight init
    beta = jnp.zeros((out_features,), dtype=jnp.float32)   # LayerNorm bias init

    # --- primary small case (grid of 1) -----------------------------------
    out = linear_layer_forward(x, w, b, gamma, beta)
    out = jax.block_until_ready(out)
    assert out.shape == (B, out_features)

    xf = x.reshape(B, -1)
    ref_bf = _reference(xf, w, b, gamma, beta, jnp.bfloat16)   # matches bf16 matmul path
    ref_32 = _reference(xf, w, b, gamma, beta, None)           # full f32 reference

    assert jnp.allclose(out, ref_bf, atol=3e-2, rtol=3e-2), \
        float(jnp.max(jnp.abs(out - ref_bf)))
    assert jnp.allclose(out, ref_32, atol=6e-2, rtol=6e-2), \
        float(jnp.max(jnp.abs(out - ref_32)))

    # --- ragged-B case (B % tile_b != 0 exercises the clamped last tile) ----
    B2 = 20
    x2 = jax.random.normal(kx2, (B2, in_features), dtype=jnp.float32)
    out2 = linear_layer_forward(x2, w, b, gamma, beta, tile_b=8)  # grid=3, last tile 4 rows
    out2 = jax.block_until_ready(out2)
    assert out2.shape == (B2, out_features)

    ref2_bf = _reference(x2, w, b, gamma, beta, jnp.bfloat16)
    assert jnp.allclose(out2, ref2_bf, atol=3e-2, rtol=3e-2), \
        float(jnp.max(jnp.abs(out2 - ref2_bf)))

    print("KERNEL_OK")
</pallas_src>

<mosaic_0001>
module attributes {stable_mosaic.version = 11 : i64} {
  func.func @_linear_ln_relu_kernel(%arg0: i32, %arg1: memref<2x1024xf32, #tpu.memory_space<vmem>>, %arg2: memref<1024x32xf32, #tpu.memory_space<vmem>>, %arg3: memref<3x32xf32, #tpu.memory_space<vmem>>, %arg4: memref<2x32xf32, #tpu.memory_space<vmem>>) attributes {dimension_semantics = [#tpu.dimension_semantics<parallel>], iteration_bounds = array<i64: 1>, scalar_prefetch = 0 : i64, scratch_operands = 0 : i64, tpu.core_type = #tpu.core_type<tc>, window_params = [{transform_indices = @transform_0, window_bounds = array<i64: 2, 1024>}, {pipeline_mode = #tpu.pipeline_mode<synchronous>, transform_indices = @transform_1, window_bounds = array<i64: 1024, 32>}, {pipeline_mode = #tpu.pipeline_mode<synchronous>, transform_indices = @transform_2, window_bounds = array<i64: 3, 32>}, {transform_indices = @transform_3, window_bounds = array<i64: 2, 32>}]} {
    %c0 = arith.constant 0 : index
    %c0_0 = arith.constant 0 : index
    %0 = vector.load %arg1[%c0, %c0_0] : memref<2x1024xf32, #tpu.memory_space<vmem>>, vector<2x1024xf32>
    %c0_1 = arith.constant 0 : index
    %c0_2 = arith.constant 0 : index
    %1 = vector.load %arg2[%c0_1, %c0_2] : memref<1024x32xf32, #tpu.memory_space<vmem>>, vector<1024x32xf32>
    %2 = arith.truncf %0 : vector<2x1024xf32> to vector<2x1024xbf16>
    %3 = arith.truncf %1 : vector<1024x32xf32> to vector<1024x32xbf16>
    %cst = arith.constant dense<0.000000e+00> : vector<2x32xf32>
    %4 = tpu.matmul %2, %3, %cst {dimension_numbers = #tpu.dot_dimension_numbers<[1], [0], [0], [1], [0, 0, 1, 1], [], []>} : vector<2x1024xbf16>, vector<1024x32xbf16>, vector<2x32xf32> -> vector<2x32xf32>
    %c0_3 = arith.constant 0 : index
    %c0_4 = arith.constant 0 : index
    %5 = vector.load %arg3[%c0_3, %c0_4] : memref<3x32xf32, #tpu.memory_space<vmem>>, vector<3x32xf32>
    %6 = vector.extract_strided_slice %5 {offsets = [0, 0], sizes = [1, 32], strides = [1, 1]} : vector<3x32xf32> to vector<1x32xf32>
    %7 = vector.extract_strided_slice %5 {offsets = [1, 0], sizes = [1, 32], strides = [1, 1]} : vector<3x32xf32> to vector<1x32xf32>
    %8 = vector.extract_strided_slice %5 {offsets = [2, 0], sizes = [1, 32], strides = [1, 1]} : vector<3x32xf32> to vector<1x32xf32>
    %9 = vector.broadcast %6 : vector<1x32xf32> to vector<2x32xf32>
    %10 = arith.addf %4, %9 : vector<2x32xf32>
    %cst_5 = arith.constant dense<0.000000e+00> : vector<2xf32>
    %11 = vector.multi_reduction <add>, %10, %cst_5 [1] : vector<2x32xf32> to vector<2xf32>
    %12 = vector.shape_cast %11 : vector<2xf32> to vector<2x1xf32>
    %cst_6 = arith.constant 3.125000e-02 : f32
    %13 = vector.broadcast %cst_6 : f32 to vector<2x1xf32>
    %14 = arith.mulf %12, %13 : vector<2x1xf32>
    %15 = vector.broadcast %14 : vector<2x1xf32> to vector<2x32xf32>
    %16 = arith.subf %10, %15 : vector<2x32xf32>
    %17 = arith.mulf %16, %16 : vector<2x32xf32>
    %cst_7 = arith.constant dense<0.000000e+00> : vector<2xf32>
    %18 = vector.multi_reduction <add>, %17, %cst_7 [1] : vector<2x32xf32> to vector<2xf32>
    %19 = vector.shape_cast %18 : vector<2xf32> to vector<2x1xf32>
    %cst_8 = arith.constant 3.125000e-02 : f32
    %20 = vector.broadcast %cst_8 : f32 to vector<2x1xf32>
    %21 = arith.mulf %19, %20 : vector<2x1xf32>
    %cst_9 = arith.constant 9.99999974E-6 : f32
    %22 = vector.broadcast %cst_9 : f32 to vector<2x1xf32>
    %23 = arith.addf %21, %22 : vector<2x1xf32>
    %24 = math.rsqrt %23 : vector<2x1xf32>
    %25 = vector.broadcast %24 : vector<2x1xf32> to vector<2x32xf32>
    %26 = arith.mulf %16, %25 : vector<2x32xf32>
    %27 = vector.broadcast %7 : vector<1x32xf32> to vector<2x32xf32>
    %28 = arith.mulf %26, %27 : vector<2x32xf32>
    %29 = vector.broadcast %8 : vector<1x32xf32> to vector<2x32xf32>
    %30 = arith.addf %28, %29 : vector<2x32xf32>
    %cst_10 = arith.constant 0.000000e+00 : f32
    %31 = vector.broadcast %cst_10 : f32 to vector<2x32xf32>
    %32 = arith.maximumf %30, %31 : vector<2x32xf32>
    %c0_11 = arith.constant 0 : index
    %c0_12 = arith.constant 0 : index
    %33 = vector.load %arg4[%c0_11, %c0_12] : memref<2x32xf32, #tpu.memory_space<vmem>>, vector<2x32xf32>
    tpu.vector_store %arg4[%c0_11, %c0_12], %32 {strides = array<i32>} : memref<2x32xf32, #tpu.memory_space<vmem>>, vector<2x32xf32>,
    return
  }
  func.func @transform_0(%arg0: i32) -> (i32, i32) {
    %c0_i32 = arith.constant 0 : i32
    %c0_i32_0 = arith.constant 0 : i32
    return %arg0, %c0_i32 : i32, i32
  }
  func.func @transform_1(%arg0: i32) -> (i32, i32) {
    %c0_i32 = arith.constant 0 : i32
    %c0_i32_0 = arith.constant 0 : i32
    %c0_i32_1 = arith.constant 0 : i32
    return %c0_i32, %c0_i32_0 : i32, i32
  }
  func.func @transform_2(%arg0: i32) -> (i32, i32) {
    %c0_i32 = arith.constant 0 : i32
    %c0_i32_0 = arith.constant 0 : i32
    %c0_i32_1 = arith.constant 0 : i32
    return %c0_i32, %c0_i32_0 : i32, i32
  }
  func.func @transform_3(%arg0: i32) -> (i32, i32) {
    %c0_i32 = arith.constant 0 : i32
    %c0_i32_0 = arith.constant 0 : i32
    return %arg0, %c0_i32 : i32, i32
  }
}

</mosaic_0001>

<llo_original>
// kernel: tpu_custom_call.1
$region0: #{tpu_custom_call.1}
  #allocation0 [shape = 'u32[]', space=smem, size = 0x4, offset = 0x4, fixed_abs, tag = 'smem constant byte address 0x4 - core index']
  #allocation1 [shape = 'u32[144,128]{1,0:T(1,128)}', space=vmem, size = 0x12000, scoped, tag = 'internal scratch']
  %s0 = inlined_call_operand.vmem [shape: f32[2,1024], index: 0, kind: input, shape index: {}]
  %s1 = inlined_call_operand.vmem [shape: f32[1024,32], index: 1, kind: input, shape index: {}]
  %s2 = inlined_call_operand.vmem [shape: f32[3,32], index: 2, kind: input, shape index: {}]
  %s3 = inlined_call_operand.hbm [shape: f32[2,32], index: 3, kind: output, shape index: {}]
  %s4 = sld [smem:[#allocation0]]
  $region22: #{tpu_custom_call.1} parent=0
    _
  %s6 = ssub.s32 1, %s4
  %s7 = scalar_select 0, %s6, %s4
  $region1: #{tpu_custom_call.1} parent=0
    #allocation2 [shape = 'u8[1024]{0}', space=vmem, size = 0x400, scoped, tag = 'output window, operand 0, single buffered']
    #allocation3 [shape = 's32[1]{0}', space=sflag, size = 0x4, scoped, tag = 'scoped memory for tpu_custom_call.1']
    %8 = vsyncpa [#allocation3], 0
    // Predicated region
    $region2: #{tpu_custom_call.1} parent=1 // pred_check
      _
    $region3: #{tpu_custom_call.1} parent=1 // pred_check_branch
      %10 = sbr.rel (0) target = $region5
    $region4: #{tpu_custom_call.1} parent=1 // pred_region
      _
    $region5: #{tpu_custom_call.1} parent=1 // pred_fallthru
      _
    // Predicated region
    $region6: #{tpu_custom_call.1} parent=1 // pred_check
      _
    $region7: #{tpu_custom_call.1} parent=1 // pred_check_branch
      %12 = sbr.rel (0) target = $region9
    $region8: #{tpu_custom_call.1} parent=1 // pred_region
      _
    $region9: #{tpu_custom_call.1} parent=1 // pred_fallthru
      _
    // Predicated region
    $region10: #{tpu_custom_call.1} parent=1 // pred_check
      _
    $region11: #{tpu_custom_call.1} parent=1 // pred_check_branch
      %14 = sbr.rel (0) target = $region13
    $region12: #{tpu_custom_call.1} parent=1 // pred_region
      _
    $region13: #{tpu_custom_call.1} parent=1 // pred_fallthru
      _
    %v16 = vld [vmem:[%s0] sm:$0xff]
    %v17 = vld [vmem:[%s0 + $0x8] sm:$0xff]
    %v18 = vld [vmem:[%s1] sm:$0xff]
    %v19 = vld [vmem:[%s1 + $0x8] sm:$0xff]
    %v20 = vld [vmem:[%s1 + $0x10] sm:$0xff]
    %v21 = vld [vmem:[%s1 + $0x18] sm:$0xff]
    %v22 = vld [vmem:[%s1 + $0x20] sm:$0xff]
    %v23 = vld [vmem:[%s1 + $0x28] sm:$0xff]
    %v24 = vld [vmem:[%s1 + $0x30] sm:$0xff]
    %v25 = vld [vmem:[%s1 + $0x38] sm:$0xff]
    %v26 = vld [vmem:[%s1 + $0x40] sm:$0xff]
    %v27 = vld [vmem:[%s1 + $0x48] sm:$0xff]
    %v28 = vld [vmem:[%s1 + $0x50] sm:$0xff]
    %v29 = vld [vmem:[%s1 + $0x58] sm:$0xff]
    %v30 = vld [vmem:[%s1 + $0x60] sm:$0xff]
    %v31 = vld [vmem:[%s1 + $0x68] sm:$0xff]
    %v32 = vld [vmem:[%s1 + $0x70] sm:$0xff]
    %v33 = vld [vmem:[%s1 + $0x78] sm:$0xff]
    %v34 = vld [vmem:[%s1 + $0x80] sm:$0xff]
    %v35 = vld [vmem:[%s1 + $0x88] sm:$0xff]
    %v36 = vld [vmem:[%s1 + $0x90] sm:$0xff]
    %v37 = vld [vmem:[%s1 + $0x98] sm:$0xff]
    %v38 = vld [vmem:[%s1 + $0xa0] sm:$0xff]
    %v39 = vld [vmem:[%s1 + $0xa8] sm:$0xff]
    %v40 = vld [vmem:[%s1 + $0xb0] sm:$0xff]
    %v41 = vld [vmem:[%s1 + $0xb8] sm:$0xff]
    %v42 = vld [vmem:[%s1 + $0xc0] sm:$0xff]
    %v43 = vld [vmem:[%s1 + $0xc8] sm:$0xff]
    %v44 = vld [vmem:[%s1 + $0xd0] sm:$0xff]
    %v45 = vld [vmem:[%s1 + $0xd8] sm:$0xff]
    %v46 = vld [vmem:[%s1 + $0xe0] sm:$0xff]
    %v47 = vld [vmem:[%s1 + $0xe8] sm:$0xff]
    %v48 = vld [vmem:[%s1 + $0xf0] sm:$0xff]
    %v49 = vld [vmem:[%s1 + $0xf8] sm:$0xff]
    %v50 = vld [vmem:[%s1 + $0x100] sm:$0xff]
    %v51 = vld [vmem:[%s1 + $0x108] sm:$0xff]
    %v52 = vld [vmem:[%s1 + $0x110] sm:$0xff]
    %v53 = vld [vmem:[%s1 + $0x118] sm:$0xff]
    %v54 = vld [vmem:[%s1 + $0x120] sm:$0xff]
    %v55 = vld [vmem:[%s1 + $0x128] sm:$0xff]
    %v56 = vld [vmem:[%s1 + $0x130] sm:$0xff]
    %v57 = vld [vmem:[%s1 + $0x138] sm:$0xff]
    %v58 = vld [vmem:[%s1 + $0x140] sm:$0xff]
    %v59 = vld [vmem:[%s1 + $0x148] sm:$0xff]
    %v60 = vld [vmem:[%s1 + $0x150] sm:$0xff]
    %v61 = vld [vmem:[%s1 + $0x158] sm:$0xff]
    %v62 = vld [vmem:[%s1 + $0x160] sm:$0xff]
    %v63 = vld [vmem:[%s1 + $0x168] sm:$0xff]
    %v64 = vld [vmem:[%s1 + $0x170] sm:$0xff]
    %v65 = vld [vmem:[%s1 + $0x178] sm:$0xff]
    %v66 = vld [vmem:[%s1 + $0x180] sm:$0xff]
    %v67 = vld [vmem:[%s1 + $0x188] sm:$0xff]
    %v68 = vld [vmem:[%s1 + $0x190] sm:$0xff]
    %v69 = vld [vmem:[%s1 + $0x198] sm:$0xff]
    %v70 = vld [vmem:[%s1 + $0x1a0] sm:$0xff]
    %v71 = vld [vmem:[%s1 + $0x1a8] sm:$0xff]
    %v72 = vld [vmem:[%s1 + $0x1b0] sm:$0xff]
    %v73 = vld [vmem:[%s1 + $0x1b8] sm:$0xff]
    %v74 = vld [vmem:[%s1 + $0x1c0] sm:$0xff]
    %v75 = vld [vmem:[%s1 + $0x1c8] sm:$0xff]
    %v76 = vld [vmem:[%s1 + $0x1d0] sm:$0xff]
    %v77 = vld [vmem:[%s1 + $0x1d8] sm:$0xff]
    %v78 = vld [vmem:[%s1 + $0x1e0] sm:$0xff]
    %v79 = vld [vmem:[%s1 + $0x1e8] sm:$0xff]
    %v80 = vld [vmem:[%s1 + $0x1f0] sm:$0xff]
    %v81 = vld [vmem:[%s1 + $0x1f8] sm:$0xff]
    %v82 = vld [vmem:[%s1 + $0x200] sm:$0xff]
    %v83 = vld [vmem:[%s1 + $0x208] sm:$0xff]
    %v84 = vld [vmem:[%s1 + $0x210] sm:$0xff]
    %v85 = vld [vmem:[%s1 + $0x218] sm:$0xff]
    %v86 = vld [vmem:[%s1 + $0x220] sm:$0xff]
    %v87 = vld [vmem:[%s1 + $0x228] sm:$0xff]
    %v88 = vld [vmem:[%s1 + $0x230] sm:$0xff]
    %v89 = vld [vmem:[%s1 + $0x238] sm:$0xff]
    %v90 = vld [vmem:[%s1 + $0x240] sm:$0xff]
    %v91 = vld [vmem:[%s1 + $0x248] sm:$0xff]
    %v92 = vld [vmem:[%s1 + $0x250] sm:$0xff]
    %v93 = vld [vmem:[%s1 + $0x258] sm:$0xff]
    %v94 = vld [vmem:[%s1 + $0x260] sm:$0xff]
    %v95 = vld [vmem:[%s1 + $0x268] sm:$0xff]
    %v96 = vld [vmem:[%s1 + $0x270] sm:$0xff]
    %v97 = vld [vmem:[%s1 + $0x278] sm:$0xff]
    %v98 = vld [vmem:[%s1 + $0x280] sm:$0xff]
    %v99 = vld [vmem:[%s1 + $0x288] sm:$0xff]
    %v100 = vld [vmem:[%s1 + $0x290] sm:$0xff]
    %v101 = vld [vmem:[%s1 + $0x298] sm:$0xff]
    %v102 = vld [vmem:[%s1 + $0x2a0] sm:$0xff]
    %v103 = vld [vmem:[%s1 + $0x2a8] sm:$0xff]
    %v104 = vld [vmem:[%s1 + $0x2b0] sm:$0xff]
    %v105 = vld [vmem:[%s1 + $0x2b8] sm:$0xff]
    %v106 = vld [vmem:[%s1 + $0x2c0] sm:$0xff]
    %v107 = vld [vmem:[%s1 + $0x2c8] sm:$0xff]
    %v108 = vld [vmem:[%s1 + $0x2d0] sm:$0xff]
    %v109 = vld [vmem:[%s1 + $0x2d8] sm:$0xff]
    %v110 = vld [vmem:[%s1 + $0x2e0] sm:$0xff]
    %v111 = vld [vmem:[%s1 + $0x2e8] sm:$0xff]
    %v112 = vld [vmem:[%s1 + $0x2f0] sm:$0xff]
    %v113 = vld [vmem:[%s1 + $0x2f8] sm:$0xff]
    %v114 = vld [vmem:[%s1 + $0x300] sm:$0xff]
    %v115 = vld [vmem:[%s1 + $0x308] sm:$0xff]
    %v116 = vld [vmem:[%s1 + $0x310] sm:$0xff]
    %v117 = vld [vmem:[%s1 + $0x318] sm:$0xff]
    %v118 = vld [vmem:[%s1 + $0x320] sm:$0xff]
    %v119 = vld [vmem:[%s1 + $0x328] sm:$0xff]
    %v120 = vld [vmem:[%s1 + $0x330] sm:$0xff]
    %v121 = vld [vmem:[%s1 + $0x338] sm:$0xff]
    %v122 = vld [vmem:[%s1 + $0x340] sm:$0xff]
    %v123 = vld [vmem:[%s1 + $0x348] sm:$0xff]
    %v124 = vld [vmem:[%s1 + $0x350] sm:$0xff]
    %v125 = vld [vmem:[%s1 + $0x358] sm:$0xff]
    %v126 = vld [vmem:[%s1 + $0x360] sm:$0xff]
    %v127 = vld [vmem:[%s1 + $0x368] sm:$0xff]
    %v128 = vld [vmem:[%s1 + $0x370] sm:$0xff]
    %v129 = vld [vmem:[%s1 + $0x378] sm:$0xff]
    %v130 = vld [vmem:[%s1 + $0x380] sm:$0xff]
    %v131 = vld [vmem:[%s1 + $0x388] sm:$0xff]
    %v132 = vld [vmem:[%s1 + $0x390] sm:$0xff]
    %v133 = vld [vmem:[%s1 + $0x398] sm:$0xff]
    %v134 = vld [vmem:[%s1 + $0x3a0] sm:$0xff]
    %v135 = vld [vmem:[%s1 + $0x3a8] sm:$0xff]
    %v136 = vld [vmem:[%s1 + $0x3b0] sm:$0xff]
    %v137 = vld [vmem:[%s1 + $0x3b8] sm:$0xff]
    %v138 = vld [vmem:[%s1 + $0x3c0] sm:$0xff]
    %v139 = vld [vmem:[%s1 + $0x3c8] sm:$0xff]
    %v140 = vld [vmem:[%s1 + $0x3d0] sm:$0xff]
    %v141 = vld [vmem:[%s1 + $0x3d8] sm:$0xff]
    %v142 = vld [vmem:[%s1 + $0x3e0] sm:$0xff]
    %v143 = vld [vmem:[%s1 + $0x3e8] sm:$0xff]
    %v144 = vld [vmem:[%s1 + $0x3f0] sm:$0xff]
    %v145 = vld [vmem:[%s1 + $0x3f8] sm:$0xff]
    %v148 = vcombine.high %v16, %v16
    %v150 = vunpack.c.l.s4 1983009808
    %v151 = vunpack.c.0.s8 %v150
    %v152 = vlaneseq
    %v153 = vshrl.u32 %v152, 7
    %v154 = vsub.s32 %v151, %v153
    %v155 = vrot.slane %v16, %v154
    %v157 = vunpack.c.l.s4 1983009808
    %v158 = vunpack.c.0.s8 %v157
    %v159 = vlaneseq
    %v160 = vshrl.u32 %v159, 7
    %v161 = vsub.s32 %v158, %v160
    %v162 = vrot.slane %v148, %v161
    %v163 = vcombine.high %v155, %v155
    %v164 = vcombine.high %v162, %v162
    %v165 = vcombine.high %v17, %v17
    %v167 = vunpack.c.l.s4 1983009808
    %v168 = vunpack.c.0.s8 %v167
    %v169 = vlaneseq
    %v170 = vshrl.u32 %v169, 7
    %v171 = vsub.s32 %v168, %v170
    %v172 = vrot.slane %v17, %v171
    %v174 = vunpack.c.l.s4 1983009808
    %v175 = vunpack.c.0.s8 %v174
    %v176 = vlaneseq
    %v177 = vshrl.u32 %v176, 7
    %v178 = vsub.s32 %v175, %v177
    %v179 = vrot.slane %v165, %v178
    %v180 = vcombine.high %v172, %v172
    %v181 = vcombine.high %v179, %v179
    %v190 = vpack.c.bf16 %v155, %v155
    %v191 = vpack.c.bf16 %v163, %v163
    %v192 = vpack.c.bf16 %v162, %v162
    %v193 = vpack.c.bf16 %v164, %v164
    %v194 = vpack.c.bf16 %v172, %v172
    %v195 = vpack.c.bf16 %v180, %v180
    %v196 = vpack.c.bf16 %v179, %v179
    %v197 = vpack.c.bf16 %v181, %v181
    %v198 = vpack.c.bf16 %v19, %v18
    %v199 = vpack.c.bf16 %v21, %v20
    %v200 = vpack.c.bf16 %v23, %v22
    %v201 = vpack.c.bf16 %v25, %v24
    %v202 = vpack.c.bf16 %v27, %v26
    %v203 = vpack.c.bf16 %v29, %v28
    %v204 = vpack.c.bf16 %v31, %v30
    %v205 = vpack.c.bf16 %v33, %v32
    %v206 = vpack.c.bf16 %v35, %v34
    %v207 = vpack.c.bf16 %v37, %v36
    %v208 = vpack.c.bf16 %v39, %v38
    %v209 = vpack.c.bf16 %v41, %v40
    %v210 = vpack.c.bf16 %v43, %v42
    %v211 = vpack.c.bf16 %v45, %v44
    %v212 = vpack.c.bf16 %v47, %v46
    %v213 = vpack.c.bf16 %v49, %v48
    %v214 = vpack.c.bf16 %v51, %v50
    %v215 = vpack.c.bf16 %v53, %v52
    %v216 = vpack.c.bf16 %v55, %v54
    %v217 = vpack.c.bf16 %v57, %v56
    %v218 = vpack.c.bf16 %v59, %v58
    %v219 = vpack.c.bf16 %v61, %v60
    %v220 = vpack.c.bf16 %v63, %v62
    %v221 = vpack.c.bf16 %v65, %v64
    %v222 = vpack.c.bf16 %v67, %v66
    %v223 = vpack.c.bf16 %v69, %v68
    %v224 = vpack.c.bf16 %v71, %v70
    %v225 = vpack.c.bf16 %v73, %v72
    %v226 = vpack.c.bf16 %v75, %v74
    %v227 = vpack.c.bf16 %v77, %v76
    %v228 = vpack.c.bf16 %v79, %v78
    %v229 = vpack.c.bf16 %v81, %v80
    %v230 = vpack.c.bf16 %v83, %v82
    %v231 = vpack.c.bf16 %v85, %v84
    %v232 = vpack.c.bf16 %v87, %v86
    %v233 = vpack.c.bf16 %v89, %v88
    %v234 = vpack.c.bf16 %v91, %v90
    %v235 = vpack.c.bf16 %v93, %v92
    %v236 = vpack.c.bf16 %v95, %v94
    %v237 = vpack.c.bf16 %v97, %v96
    %v238 = vpack.c.bf16 %v99, %v98
    %v239 = vpack.c.bf16 %v101, %v100
    %v240 = vpack.c.bf16 %v103, %v102
    %v241 = vpack.c.bf16 %v105, %v104
    %v242 = vpack.c.bf16 %v107, %v106
    %v243 = vpack.c.bf16 %v109, %v108
    %v244 = vpack.c.bf16 %v111, %v110
    %v245 = vpack.c.bf16 %v113, %v112
    %v246 = vpack.c.bf16 %v115, %v114
    %v247 = vpack.c.bf16 %v117, %v116
    %v248 = vpack.c.bf16 %v119, %v118
    %v249 = vpack.c.bf16 %v121, %v120
    %v250 = vpack.c.bf16 %v123, %v122
    %v251 = vpack.c.bf16 %v125, %v124
    %v252 = vpack.c.bf16 %v127, %v126
    %v253 = vpack.c.bf16 %v129, %v128
    %v254 = vpack.c.bf16 %v131, %v130
    %v255 = vpack.c.bf16 %v133, %v132
    %v256 = vpack.c.bf16 %v135, %v134
    %v257 = vpack.c.bf16 %v137, %v136
    %v258 = vpack.c.bf16 %v139, %v138
    %v259 = vpack.c.bf16 %v141, %v140
    %v260 = vpack.c.bf16 %v143, %v142
    %v261 = vpack.c.bf16 %v145, %v144
    %v262 = vld [vmem:[%s2] sm:$0x7]
    %v263 = vlaneseq
    %v264 = vshrl.u32 %v263, 7
    %v265 = vsub.s32 0, %v264
    %v266 = vrot.slane %v262, %v265
    %267 = vmatprep.subr.bf16.mxu0 0
    %268 = vmatpush1.bf16.msra.mxu0 %v198
    %269 = vmatprep.subr.bf16.mxu0 0
    %270 = vmatpush1.bf16.msra.mxu0 %v199
    %271 = vmatprep.subr.bf16.mxu0 0
    %272 = vmatpush1.bf16.msra.mxu0 %v200
    %273 = vmatprep.subr.bf16.mxu0 0
    %274 = vmatpush1.bf16.msra.mxu0 %v201
    %275 = vmatprep.subr.bf16.mxu0 0
    %276 = vmatpush1.bf16.msra.mxu0 %v202
    %277 = vmatprep.subr.bf16.mxu0 0
    %278 = vmatpush1.bf16.msra.mxu0 %v203
    %279 = vmatprep.subr.bf16.mxu0 0
    %280 = vmatpush1.bf16.msra.mxu0 %v204
    %281 = vmatprep.subr.bf16.mxu0 0
    %282 = vmatpush1.bf16.msra.mxu0 %v205
    %283 = vmatprep.subr.bf16.mxu0 0
    %284 = vmatpush1.bf16.msra.mxu0 %v206
    %285 = vmatprep.subr.bf16.mxu0 0
    %286 = vmatpush1.bf16.msra.mxu0 %v207
    %287 = vmatprep.subr.bf16.mxu0 0
    %288 = vmatpush1.bf16.msra.mxu0 %v208
    %289 = vmatprep.subr.bf16.mxu0 0
    %290 = vmatpush1.bf16.msra.mxu0 %v209
    %291 = vmatprep.subr.bf16.mxu0 0
    %292 = vmatpush1.bf16.msra.mxu0 %v210
    %293 = vmatprep.subr.bf16.mxu0 0
    %294 = vmatpush1.bf16.msra.mxu0 %v211
    %295 = vmatprep.subr.bf16.mxu0 0
    %296 = vmatpush1.bf16.msra.mxu0 %v212
    %297 = vmatprep.subr.bf16.mxu0 0
    %298 = vmatpush1.bf16.msra.mxu0 %v213
    %299 = vmatprep.mubr.bf16.mxu0 %v191
    %300 = vmatmul.mubr.bf16.gmra.mrb[0].mxu0 %v190
    %v301 = vpop.f32.mrb[0].mxu0
    %v302 = vadd.f32 %v266, %v301
    %v303 = vpop.f32.mrb[0].mxu0
    %v304 = vpop.f32.mrb[0].mxu0
    %v305 = vpop.f32.mrb[0].mxu0
    %306 = vdwg.mxu0
    %307 = vmatprep.subr.bf16.mxu0 0
    %308 = vmatpush1.bf16.msra.mxu0 %v214
    %309 = vmatprep.subr.bf16.mxu0 0
    %310 = vmatpush1.bf16.msra.mxu0 %v215
    %311 = vmatprep.subr.bf16.mxu0 0
    %312 = vmatpush1.bf16.msra.mxu0 %v216
    %313 = vmatprep.subr.bf16.mxu0 0
    %314 = vmatpush1.bf16.msra.mxu0 %v217
    %315 = vmatprep.subr.bf16.mxu0 0
    %316 = vmatpush1.bf16.msra.mxu0 %v218
    %317 = vmatprep.subr.bf16.mxu0 0
    %318 = vmatpush1.bf16.msra.mxu0 %v219
    %319 = vmatprep.subr.bf16.mxu0 0
    %320 = vmatpush1.bf16.msra.mxu0 %v220
    %321 = vmatprep.subr.bf16.mxu0 0
    %322 = vmatpush1.bf16.msra.mxu0 %v221
    %323 = vmatprep.subr.bf16.mxu0 0
    %324 = vmatpush1.bf16.msra.mxu0 %v222
    %325 = vmatprep.subr.bf16.mxu0 0
    %326 = vmatpush1.bf16.msra.mxu0 %v223
    %327 = vmatprep.subr.bf16.mxu0 0
    %328 = vmatpush1.bf16.msra.mxu0 %v224
    %329 = vmatprep.subr.bf16.mxu0 0
    %330 = vmatpush1.bf16.msra.mxu0 %v225
    %331 = vmatprep.subr.bf16.mxu0 0
    %332 = vmatpush1.bf16.msra.mxu0 %v226
    %333 = vmatprep.subr.bf16.mxu0 0
    %334 = vmatpush1.bf16.msra.mxu0 %v227
    %335 = vmatprep.subr.bf16.mxu0 0
    %336 = vmatpush1.bf16.msra.mxu0 %v228
    %337 = vmatprep.subr.bf16.mxu0 0
    %338 = vmatpush1.bf16.msra.mxu0 %v229
    %339 = vmatprep.mubr.bf16.mxu0 %v193
    %340 = vmatmul.mubr.bf16.gmra.mrb[0].mxu0 %v192
    %v341 = vpop.f32.mrb[0].mxu0
    %v342 = vadd.f32 %v302, %v341
    %v343 = vpop.f32.mrb[0].mxu0
    %v344 = vpop.f32.mrb[0].mxu0
    %v345 = vpop.f32.mrb[0].mxu0
    %346 = vdwg.mxu0
    %347 = vmatprep.subr.bf16.mxu0 0
    %348 = vmatpush1.bf16.msra.mxu0 %v230
    %349 = vmatprep.subr.bf16.mxu0 0
    %350 = vmatpush1.bf16.msra.mxu0 %v231
    %351 = vmatprep.subr.bf16.mxu0 0
    %352 = vmatpush1.bf16.msra.mxu0 %v232
    %353 = vmatprep.subr.bf16.mxu0 0
    %354 = vmatpush1.bf16.msra.mxu0 %v233
    %355 = vmatprep.subr.bf16.mxu0 0
    %356 = vmatpush1.bf16.msra.mxu0 %v234
    %357 = vmatprep.subr.bf16.mxu0 0
    %358 = vmatpush1.bf16.msra.mxu0 %v235
    %359 = vmatprep.subr.bf16.mxu0 0
    %360 = vmatpush1.bf16.msra.mxu0 %v236
    %361 = vmatprep.subr.bf16.mxu0 0
    %362 = vmatpush1.bf16.msra.mxu0 %v237
    %363 = vmatprep.subr.bf16.mxu0 0
    %364 = vmatpush1.bf16.msra.mxu0 %v238
    %365 = vmatprep.subr.bf16.mxu0 0
    %366 = vmatpush1.bf16.msra.mxu0 %v239
    %367 = vmatprep.subr.bf16.mxu0 0
    %368 = vmatpush1.bf16.msra.mxu0 %v240
    %369 = vmatprep.subr.bf16.mxu0 0
    %370 = vmatpush1.bf16.msra.mxu0 %v241
    %371 = vmatprep.subr.bf16.mxu0 0
    %372 = vmatpush1.bf16.msra.mxu0 %v242
    %373 = vmatprep.subr.bf16.mxu0 0
    %374 = vmatpush1.bf16.msra.mxu0 %v243
    %375 = vmatprep.subr.bf16.mxu0 0
    %376 = vmatpush1.bf16.msra.mxu0 %v244
    %377 = vmatprep.subr.bf16.mxu0 0
    %378 = vmatpush1.bf16.msra.mxu0 %v245
    %379 = vmatprep.mubr.bf16.mxu0 %v195
    %380 = vmatmul.mubr.bf16.gmra.mrb[0].mxu0 %v194
    %v381 = vpop.f32.mrb[0].mxu0
    %v382 = vadd.f32 %v342, %v381
    %v383 = vpop.f32.mrb[0].mxu0
    %v384 = vpop.f32.mrb[0].mxu0
    %v385 = vpop.f32.mrb[0].mxu0
    %386 = vdwg.mxu0
    %387 = vmatprep.subr.bf16.mxu0 0
    %388 = vmatpush1.bf16.msra.mxu0 %v246
    %389 = vmatprep.subr.bf16.mxu0 0
    %390 = vmatpush1.bf16.msra.mxu0 %v247
    %391 = vmatprep.subr.bf16.mxu0 0
    %392 = vmatpush1.bf16.msra.mxu0 %v248
    %393 = vmatprep.subr.bf16.mxu0 0
    %394 = vmatpush1.bf16.msra.mxu0 %v249
    %395 = vmatprep.subr.bf16.mxu0 0
    %396 = vmatpush1.bf16.msra.mxu0 %v250
    %397 = vmatprep.subr.bf16.mxu0 0
    %398 = vmatpush1.bf16.msra.mxu0 %v251
    %399 = vmatprep.subr.bf16.mxu0 0
    %400 = vmatpush1.bf16.msra.mxu0 %v252
    %401 = vmatprep.subr.bf16.mxu0 0
    %402 = vmatpush1.bf16.msra.mxu0 %v253
    %403 = vmatprep.subr.bf16.mxu0 0
    %404 = vmatpush1.bf16.msra.mxu0 %v254
    %405 = vmatprep.subr.bf16.mxu0 0
    %406 = vmatpush1.bf16.msra.mxu0 %v255
    %407 = vmatprep.subr.bf16.mxu0 0
    %408 = vmatpush1.bf16.msra.mxu0 %v256
    %409 = vmatprep.subr.bf16.mxu0 0
    %410 = vmatpush1.bf16.msra.mxu0 %v257
    %411 = vmatprep.subr.bf16.mxu0 0
    %412 = vmatpush1.bf16.msra.mxu0 %v258
    %413 = vmatprep.subr.bf16.mxu0 0
    %414 = vmatpush1.bf16.msra.mxu0 %v259
    %415 = vmatprep.subr.bf16.mxu0 0
    %416 = vmatpush1.bf16.msra.mxu0 %v260
    %417 = vmatprep.subr.bf16.mxu0 0
    %418 = vmatpush1.bf16.msra.mxu0 %v261
    %419 = vmatprep.mubr.bf16.mxu0 %v197
    %420 = vmatmul.mubr.bf16.gmra.mrb[0].mxu0 %v196
    %v421 = vpop.f32.mrb[0].mxu0
    %v422 = vadd.f32 %v382, %v421
    %v423 = vpop.f32.mrb[0].mxu0
    %v424 = vpop.f32.mrb[0].mxu0
    %v425 = vpop.f32.mrb[0].mxu0
    %426 = vdwg.mxu0
    %vm427 = vcmask 254976
    %v428 = vsel %vm427, %v422, 0.0
    %429 = vadd.xlane.f32.xlu0 %v428
    %v430 = vpop.xlane.xlu0 %429
    %v431 = vmul.f32 %v430, 0.03125
    %v432 = vsub.f32 %v422, %v431
    %v433 = vmul.f32 %v432, %v432
    %v434 = vsel %vm427, %v433, 0.0
    %435 = vadd.xlane.f32.xlu0 %v434
    %v436 = vpop.xlane.xlu0 %435
    %v437 = vmul.f32 %v436, 0.03125
    %v438 = vadd.f32 %v437, 1e-05
    %v439 = vrsqrt.pop %v438
    %v440 = vmul.f32 %v432, %v439
    %v441 = vlaneseq
    %v442 = vshrl.u32 %v441, 7
    %v443 = vsub.s32 1, %v442
    %v444 = vrot.slane %v262, %v443
    %v445 = vmul.f32 %v440, %v444
    %v446 = vlaneseq
    %v447 = vshrl.u32 %v446, 7
    %v448 = vsub.s32 2, %v447
    %v449 = vrot.slane %v262, %v448
    %v450 = vadd.f32 %v445, %v449
    %v451 = vmax.f32 %v450, 0.0
    %452 = vst.msk [vmem:[#allocation2] sm:$0x3] %vm427, %v451
    // Predicated region
    $region14: #{tpu_custom_call.1} parent=1 // pred_check
      _
    $region15: #{tpu_custom_call.1} parent=1 // pred_check_branch
      %454 = sbr.rel (0) target = $region17
    $region16: #{tpu_custom_call.1} parent=1 // pred_region
      %s456 = ssub.s32 32, 32
      %457 = vsyncadd [#allocation3], %s456
      %s459 = sshll.u32 [#allocation2], 4
      %s460 = int_to_ptr.vmem [resolvable:$true] %s459
      %462 = dma.vmem_to_hbm [thread:$0]  %s460, 32, %s3, [#allocation3]
    $region17: #{tpu_custom_call.1} parent=1 // pred_fallthru
      _
    // Predicated region
    $region18: #{tpu_custom_call.1} parent=1 // pred_check
      _
    $region19: #{tpu_custom_call.1} parent=1 // pred_check_branch
      %464 = sbr.rel (0) target = $region21
    $region20: #{tpu_custom_call.1} parent=1 // pred_region
      %465 = dma.done [#allocation3], 32
    $region21: #{tpu_custom_call.1} parent=1 // pred_fallthru
      _
    %466 = vsyncpa [#allocation3], 1

</llo_original>
